<compile_context>
chip_gen: v7x
topology: tpu7x:2x2x1
jax: 0.10.0
libtpu: 0.0.40
codegen_flags: <defaults>
</compile_context>

<pallas_src>
import functools

import jax
import jax.numpy as jnp
from jax import lax
from jax.experimental import pallas as pl
from jax.experimental.pallas import tpu as pltpu


def _round_up(n, m):
    return ((n + m - 1) // m) * m


def _mlp_kernel(n_feature, n_output, xT_ref, p_ref, o_ref):
    """One batch block, everything resident in VMEM.

    xT_ref : (n_feature, B_BLK)                      -- batch on lanes
    p_ref  : (n_hidden, n_feature + 1 + 2*n_output)  -- packed [w1 | b1 | w2^T | b2]
    o_ref  : (n_output, B_BLK)                       -- lane-dense output
    """
    F, O = n_feature, n_output

    xT = xT_ref[...]                                   # (F, B_BLK)
    w1 = p_ref[:, 0:F]                                 # (H, F)   static views: free
    b1 = p_ref[:, F : F + 1]                           # (H, 1)
    w2t = p_ref[:, F + 1 : F + 1 + O]                  # (H, O)
    b2 = p_ref[0:1, F + 1 + O : F + 1 + 2 * O]         # (1, O)

    # ---- hidden = relu(W1 @ x^T + b1) : (H, B_BLK) ---------------------------
    if F <= 8:
        # K is tiny: broadcast multiply-accumulate on the VPU beats a degenerate
        # MXU matmul.
        h = w1[:, 0:1] * xT[0:1, :]
        for f in range(1, F):                          # static, unrolled
            h = h + w1[:, f : f + 1] * xT[f : f + 1, :]
    else:
        h = jnp.dot(w1, xT, preferred_element_type=jnp.float32)
    h = jnp.maximum(h + b1, 0.0)

    # ---- out = W2 @ hidden + b2 : (O, B_BLK) ----------------------------------
    if O <= 8:
        # N is tiny: elementwise multiply (VPU) + cross-sublane reduce (XLU),
        # full 128-lane unmasked store per output row.
        for o in range(O):                             # static, unrolled
            row = jnp.sum(h * w2t[:, o : o + 1], axis=0, keepdims=True)
            o_ref[o : o + 1, :] = (row + b2[0:1, o : o + 1]).astype(o_ref.dtype)
    else:
        out = lax.dot_general(
            w2t, h, (((0,), (0,)), ((), ())), preferred_element_type=jnp.float32
        )                                              # (O, B_BLK)
        o_ref[...] = (out + jnp.transpose(b2)).astype(o_ref.dtype)


@jax.jit
def net_forward(x, w1, b1, w2, b2):
    """Forward pass matching torch `Net`.

    PyTorch layouts:
      x  : (B, n_feature)
      w1 : (n_hidden, n_feature)   (self.hidden.weight)
      b1 : (n_hidden,)             (self.hidden.bias)
      w2 : (n_output, n_hidden)    (self.predict.weight)
      b2 : (n_output,)             (self.predict.bias)
    Returns (B, n_output).
    """
    B, n_feature = x.shape
    n_hidden = w1.shape[0]
    n_output = w2.shape[0]
    dtype = x.dtype

    # Large lane blocks amortize per-grid-step overhead; 16384 f32 lanes x
    # (8,128) tile padding x double buffering for x + out is still << scoped
    # VMEM defaults on all generations.
    B_BLK = min(16384, max(128, _round_up(B, 128)))
    n_blocks = pl.cdiv(B, B_BLK)

    # Lane-dense layout: batch on the 128-lane axis (cheap transpose, fused
    # under jit).  No explicit zero-pad: Pallas handles the ragged tail block.
    xT = x.T                                            # (n_feature, B)

    # Pack all parameters into a single small VMEM operand: 1 DMA instead of 4.
    n_cols = n_feature + 1 + 2 * n_output
    packed = jnp.concatenate(
        [
            w1.astype(dtype),                                           # (H, F)
            b1.reshape(n_hidden, 1).astype(dtype),                      # (H, 1)
            w2.T.astype(dtype),                                         # (H, O)
            jnp.broadcast_to(b2.reshape(1, n_output).astype(dtype),
                             (n_hidden, n_output)),                     # (H, O)
        ],
        axis=1,
    )

    out = pl.pallas_call(
        functools.partial(_mlp_kernel, n_feature, n_output),
        out_shape=jax.ShapeDtypeStruct((n_output, B), dtype),
        grid=(n_blocks,),
        in_specs=[
            pl.BlockSpec((n_feature, B_BLK), lambda i: (0, i)),
            pl.BlockSpec((n_hidden, n_cols), lambda i: (0, 0)),
        ],
        out_specs=pl.BlockSpec((n_output, B_BLK), lambda i: (0, i)),
        compiler_params=pltpu.CompilerParams(dimension_semantics=("parallel",)),
    )(xT, packed)

    # Slice-free: out is exactly (n_output, B); the transpose fuses under jit.
    return out.T


def init_params(key, n_feature, n_hidden, n_output, dtype=jnp.float32):
    """Deterministic init mimicking torch.nn.Linear default
    (uniform(-1/sqrt(fan_in), 1/sqrt(fan_in))), PyTorch weight layout."""
    k1, k2, k3, k4 = jax.random.split(key, 4)
    bound1 = 1.0 / (n_feature ** 0.5)
    bound2 = 1.0 / (n_hidden ** 0.5)
    w1 = jax.random.uniform(k1, (n_hidden, n_feature), dtype, -bound1, bound1)
    b1 = jax.random.uniform(k2, (n_hidden,), dtype, -bound1, bound1)
    w2 = jax.random.uniform(k3, (n_output, n_hidden), dtype, -bound2, bound2)
    b2 = jax.random.uniform(k4, (n_output,), dtype, -bound2, bound2)
    return w1, b1, w2, b2


if __name__ == "__main__":
    n_feature, n_hidden, n_output = 1, 32, 1
    batch = 100

    key = jax.random.PRNGKey(0)
    w1, b1, w2, b2 = init_params(key, n_feature, n_hidden, n_output)

    # Same input the original script builds: linspace(-1, 1, 100)[:, None]
    x = jnp.linspace(-1.0, 1.0, batch, dtype=jnp.float32).reshape(batch, n_feature)

    out = jax.block_until_ready(net_forward(x, w1, b1, w2, b2))

    # Reference check in plain JAX (PyTorch Linear semantics: x @ W^T + b)
    ref = jnp.maximum(x @ w1.T + b1, 0.0) @ w2.T + b2
    assert out.shape == (batch, n_output)
    assert jnp.allclose(out, ref, atol=1e-5, rtol=1e-5)

    print("KERNEL_OK")
</pallas_src>

<mosaic_0001>
module attributes {stable_mosaic.version = 11 : i64} {
  func.func @_mlp_kernel(%arg0: i32, %arg1: memref<1x128xf32, #tpu.memory_space<vmem>>, %arg2: memref<32x4xf32, #tpu.memory_space<vmem>>, %arg3: memref<1x128xf32, #tpu.memory_space<vmem>>) attributes {dimension_semantics = [#tpu.dimension_semantics<parallel>], iteration_bounds = array<i64: 1>, scalar_prefetch = 0 : i64, scratch_operands = 0 : i64, tpu.core_type = #tpu.core_type<tc>, window_params = [{transform_indices = @transform_0, window_bounds = array<i64: 1, 128>}, {pipeline_mode = #tpu.pipeline_mode<synchronous>, transform_indices = @transform_1, window_bounds = array<i64: 32, 4>}, {transform_indices = @transform_2, window_bounds = array<i64: 1, 128>}]} {
    %c0 = arith.constant 0 : index
    %c0_0 = arith.constant 0 : index
    %0 = vector.load %arg1[%c0, %c0_0] : memref<1x128xf32, #tpu.memory_space<vmem>>, vector<1x128xf32>
    %c0_1 = arith.constant 0 : index
    %c0_2 = arith.constant 0 : index
    %1 = vector.load %arg2[%c0_1, %c0_2] : memref<32x4xf32, #tpu.memory_space<vmem>>, vector<32x1xf32>
    %c0_3 = arith.constant 0 : index
    %c1 = arith.constant 1 : index
    %2 = vector.load %arg2[%c0_3, %c1] : memref<32x4xf32, #tpu.memory_space<vmem>>, vector<32x1xf32>
    %c0_4 = arith.constant 0 : index
    %c2 = arith.constant 2 : index
    %3 = vector.load %arg2[%c0_4, %c2] : memref<32x4xf32, #tpu.memory_space<vmem>>, vector<32x1xf32>
    %c0_5 = arith.constant 0 : index
    %c3 = arith.constant 3 : index
    %4 = vector.load %arg2[%c0_5, %c3] : memref<32x4xf32, #tpu.memory_space<vmem>>, vector<1x1xf32>
    %5 = vector.broadcast %1 : vector<32x1xf32> to vector<32x128xf32>
    %6 = vector.broadcast %0 : vector<1x128xf32> to vector<32x128xf32>
    %7 = arith.mulf %5, %6 : vector<32x128xf32>
    %8 = vector.broadcast %2 : vector<32x1xf32> to vector<32x128xf32>
    %9 = arith.addf %7, %8 : vector<32x128xf32>
    %cst = arith.constant 0.000000e+00 : f32
    %10 = vector.broadcast %cst : f32 to vector<32x128xf32>
    %11 = arith.maximumf %9, %10 : vector<32x128xf32>
    %12 = vector.broadcast %3 : vector<32x1xf32> to vector<32x128xf32>
    %13 = arith.mulf %11, %12 : vector<32x128xf32>
    %cst_6 = arith.constant dense<0.000000e+00> : vector<128xf32>
    %14 = vector.multi_reduction <add>, %13, %cst_6 [0] : vector<32x128xf32> to vector<128xf32>
    %15 = vector.shape_cast %14 : vector<128xf32> to vector<1x128xf32>
    %16 = vector.broadcast %4 : vector<1x1xf32> to vector<1x128xf32>
    %17 = arith.addf %15, %16 : vector<1x128xf32>
    %c0_7 = arith.constant 0 : index
    %c0_8 = arith.constant 0 : index
    %18 = vector.load %arg3[%c0_7, %c0_8] : memref<1x128xf32, #tpu.memory_space<vmem>>, vector<1x128xf32>
    tpu.vector_store %arg3[%c0_7, %c0_8], %17 {strides = array<i32>} : memref<1x128xf32, #tpu.memory_space<vmem>>, vector<1x128xf32>,
    return
  }
  func.func @transform_0(%arg0: i32) -> (i32, i32) {
    %c0_i32 = arith.constant 0 : i32
    %c0_i32_0 = arith.constant 0 : i32
    return %c0_i32, %arg0 : i32, i32
  }
  func.func @transform_1(%arg0: i32) -> (i32, i32) {
    %c0_i32 = arith.constant 0 : i32
    %c0_i32_0 = arith.constant 0 : i32
    %c0_i32_1 = arith.constant 0 : i32
    return %c0_i32, %c0_i32_0 : i32, i32
  }
  func.func @transform_2(%arg0: i32) -> (i32, i32) {
    %c0_i32 = arith.constant 0 : i32
    %c0_i32_0 = arith.constant 0 : i32
    return %c0_i32, %arg0 : i32, i32
  }
}

</mosaic_0001>

<llo_original>
// kernel: net_forward.1
$region0: #{net_forward.1}
  #allocation0 [shape = 'u32[]', space=smem, size = 0x4, offset = 0x4, fixed_abs, tag = 'smem constant byte address 0x4 - core index']
  #allocation1 [shape = 'u32[144,128]{1,0:T(1,128)}', space=vmem, size = 0x12000, scoped, tag = 'internal scratch']
  %s0 = inlined_call_operand.vmem [shape: f32[1,100], index: 0, kind: input, shape index: {}]
  %s1 = inlined_call_operand.vmem [shape: f32[32,4], index: 1, kind: input, shape index: {}]
  %s2 = inlined_call_operand.hbm [shape: f32[1,100], index: 2, kind: output, shape index: {}]
  %s3 = sld [smem:[#allocation0]]
  $region18: #{net_forward.1} parent=0
    _
  %s5 = ssub.s32 1, %s3
  %s6 = scalar_select 0, %s5, %s3
  $region1: #{net_forward.1} parent=0
    #allocation2 [shape = 'u8[512]{0}', space=vmem, size = 0x400, scoped, tag = 'output window, operand 0, single buffered']
    #allocation3 [shape = 's32[1]{0}', space=sflag, size = 0x4, scoped, tag = 'scoped memory for net_forward.1']
    %7 = vsyncpa [#allocation3], 0
    // Predicated region
    $region2: #{net_forward.1} parent=1 // pred_check
      _
    $region3: #{net_forward.1} parent=1 // pred_check_branch
      %9 = sbr.rel (0) target = $region5
    $region4: #{net_forward.1} parent=1 // pred_region
      _
    $region5: #{net_forward.1} parent=1 // pred_fallthru
      _
    // Predicated region
    $region6: #{net_forward.1} parent=1 // pred_check
      _
    $region7: #{net_forward.1} parent=1 // pred_check_branch
      %11 = sbr.rel (0) target = $region9
    $region8: #{net_forward.1} parent=1 // pred_region
      _
    $region9: #{net_forward.1} parent=1 // pred_fallthru
      _
    %v12 = vld [vmem:[%s0] sm:$0x1]
    %v13 = vld [vmem:[%s1] sm:$0xff]
    %v14 = vld [vmem:[%s1 + $0x8] sm:$0xff]
    %v15 = vld [vmem:[%s1 + $0x10] sm:$0xff]
    %v16 = vld [vmem:[%s1 + $0x18] sm:$0xff]
    %v17 = vld [vmem:[%s1] sm:$0x1]
    %19 = vset.pattern.permute.xlu0 0
    %20 = vperm.xlu0 %19, %v13
    %v21 = vpop.permute.xlu0 %20
    %24 = vset.pattern.permute.xlu0 0
    %25 = vperm.xlu0 %24, %v14
    %v26 = vpop.permute.xlu0 %25
    %29 = vset.pattern.permute.xlu0 0
    %30 = vperm.xlu0 %29, %v15
    %v31 = vpop.permute.xlu0 %30
    %34 = vset.pattern.permute.xlu0 0
    %35 = vperm.xlu0 %34, %v16
    %v36 = vpop.permute.xlu0 %35
    %v39 = vlaneseq
    %v40 = vshrl.u32 %v39, 7
    %v41 = vsub.s32 0, %v40
    %v42 = vrot.slane %v12, %v41
    %v44 = vmul.f32 %v21, %v42
    %v45 = vmul.f32 %v26, %v42
    %v46 = vmul.f32 %v31, %v42
    %v47 = vmul.f32 %v36, %v42
    %48 = vset.pattern.permute.xlu0 1
    %49 = vperm.xlu0 %48, %v13
    %v50 = vpop.permute.xlu0 %49
    %52 = vset.pattern.permute.xlu0 1
    %53 = vperm.xlu0 %52, %v14
    %v54 = vpop.permute.xlu0 %53
    %56 = vset.pattern.permute.xlu0 1
    %57 = vperm.xlu0 %56, %v15
    %v58 = vpop.permute.xlu0 %57
    %60 = vset.pattern.permute.xlu0 1
    %61 = vperm.xlu0 %60, %v16
    %v62 = vpop.permute.xlu0 %61
    %v64 = vadd.f32 %v44, %v50
    %v65 = vadd.f32 %v45, %v54
    %v66 = vadd.f32 %v46, %v58
    %v67 = vadd.f32 %v47, %v62
    %v68 = vmax.f32 %v64, 0.0
    %v69 = vmax.f32 %v65, 0.0
    %v70 = vmax.f32 %v66, 0.0
    %v71 = vmax.f32 %v67, 0.0
    %72 = vset.pattern.permute.xlu0 2
    %73 = vperm.xlu0 %72, %v13
    %v74 = vpop.permute.xlu0 %73
    %76 = vset.pattern.permute.xlu0 2
    %77 = vperm.xlu0 %76, %v14
    %v78 = vpop.permute.xlu0 %77
    %80 = vset.pattern.permute.xlu0 2
    %81 = vperm.xlu0 %80, %v15
    %v82 = vpop.permute.xlu0 %81
    %84 = vset.pattern.permute.xlu0 2
    %85 = vperm.xlu0 %84, %v16
    %v86 = vpop.permute.xlu0 %85
    %v88 = vmul.f32 %v68, %v74
    %v89 = vmul.f32 %v69, %v78
    %v90 = vmul.f32 %v70, %v82
    %v91 = vmul.f32 %v71, %v86
    %v92 = vadd.f32 %v88, %v89
    %v93 = vadd.f32 %v92, %v90
    %v94 = vadd.f32 %v93, %v91
    %v95 = vrot.slane %v94, 4
    %v96 = vadd.f32 %v94, %v95
    %v97 = vrot.slane %v96, 2
    %v98 = vadd.f32 %v96, %v97
    %v99 = vrot.slane %v98, 1
    %v100 = vadd.f32 %v98, %v99
    %102 = vset.pattern.permute.xlu0 3
    %103 = vperm.xlu0 %102, %v17
    %v104 = vpop.permute.xlu0 %103
    %v106 = vadd.f32 %v100, %v104
    %107 = vst [vmem:[#allocation2] sm:$0x1] %v106
    // Predicated region
    $region10: #{net_forward.1} parent=1 // pred_check
      _
    $region11: #{net_forward.1} parent=1 // pred_check_branch
      %109 = sbr.rel (0) target = $region13
    $region12: #{net_forward.1} parent=1 // pred_region
      %s111 = ssub.s32 16, 16
      %112 = vsyncadd [#allocation3], %s111
      %s114 = sshll.u32 [#allocation2], 4
      %s115 = int_to_ptr.vmem [resolvable:$true] %s114
      %117 = dma.vmem_to_hbm [thread:$0]  %s115, 16, %s2, [#allocation3]
    $region13: #{net_forward.1} parent=1 // pred_fallthru
      _
    // Predicated region
    $region14: #{net_forward.1} parent=1 // pred_check
      _
    $region15: #{net_forward.1} parent=1 // pred_check_branch
      %119 = sbr.rel (0) target = $region17
    $region16: #{net_forward.1} parent=1 // pred_region
      %120 = dma.done [#allocation3], 16
    $region17: #{net_forward.1} parent=1 // pred_fallthru
      _
    %121 = vsyncpa [#allocation3], 1

</llo_original>
